<compile_context>
chip_gen: v6e
topology: v6e:2x2x1
jax: 0.10.0
libtpu: 0.0.40
codegen_flags: <defaults>
</compile_context>

<pallas_src>
import jax
import jax.numpy as jnp
from jax import lax
from jax.experimental import pallas as pl
from jax.experimental.pallas import tpu as pltpu


def linear_kernel(x_ref, w_ref, b_ref, o_ref):
    # x_ref: (tm, K)   w_ref: (N, K)   b_ref: (1, N)   o_ref: (tm, N)
    # Contract on K (dim 1 of both operands) -> (tm, N); f32 MXU accumulation.
    acc = lax.dot_general(
        x_ref[...], w_ref[...],
        dimension_numbers=(((1,), (1,)), ((), ())),
        preferred_element_type=jnp.float32,
    )
    o_ref[...] = acc + b_ref[...]          # f32 epilogue (bias broadcast over rows)


def mock_image_classifier(x_nchw, weight, bias, *, tm=128):
    """x_nchw: (B, C, H, W) f32; weight: (N, K=C*H*W); bias: (N,) -> (B, N)."""
    B = x_nchw.shape[0]
    K = x_nchw.shape[1] * x_nchw.shape[2] * x_nchw.shape[3]
    N = weight.shape[0]

    x_flat = x_nchw.reshape(B, K)          # torch.flatten(x, 1): row-major (C,H,W)
    b2d = bias.reshape(1, N)

    # Batch tile: tm rows per grid step.  If B < tm use the full batch as a
    # single block (a block whose sublane dim equals the full array dim is
    # always legal, even when B is not a multiple of 8).
    tm_eff = tm if B >= tm else B
    grid = (pl.cdiv(B, tm_eff),)

    cost = pl.CostEstimate(
        flops=2 * B * K * N,
        transcendentals=0,
        bytes_accessed=B * K * 4 + N * K * 4 + B * N * 4 + N * 4,
    )

    return pl.pallas_call(
        linear_kernel,
        out_shape=jax.ShapeDtypeStruct((B, N), jnp.float32),
        grid=grid,
        in_specs=[
            pl.BlockSpec((tm_eff, K), lambda i: (i, 0)),   # activations: tiled over B
            pl.BlockSpec((N, K), lambda i: (0, 0)),        # weight: whole, native (N,K)
            pl.BlockSpec((1, N), lambda i: (0, 0)),        # bias: whole
        ],
        out_specs=pl.BlockSpec((tm_eff, N), lambda i: (i, 0)),
        compiler_params=pltpu.CompilerParams(
            dimension_semantics=("parallel",),
        ),
        cost_estimate=cost,
    )(x_flat, weight, b2d)


if __name__ == "__main__":
    # Small shapes consistent with the module: size=16, n_channels=3, n_classes=10
    B, C, H, W = 2, 3, 16, 16
    n_classes = 10
    K = C * H * W

    key = jax.random.PRNGKey(0)
    kx, kw, kb = jax.random.split(key, 3)

    x = jax.random.normal(kx, (B, C, H, W), dtype=jnp.float32)
    # Deterministic param init (shapes match nn.Linear(K, n_classes)):
    # weight: (n_classes, K), bias: (n_classes,)
    bound = 1.0 / (K ** 0.5)
    weight = jax.random.uniform(kw, (n_classes, K), jnp.float32, -bound, bound)
    bias = jax.random.uniform(kb, (n_classes,), jnp.float32, -bound, bound)

    out = mock_image_classifier(x, weight, bias)
    out = jax.block_until_ready(out)

    # Sanity check against plain-JAX reference.
    ref = x.reshape(B, K) @ weight.T + bias
    assert out.shape == (B, n_classes)
    assert jnp.allclose(out, ref, atol=1e-4, rtol=1e-4)

    print("KERNEL_OK")
</pallas_src>

<mosaic_0001>
module attributes {stable_mosaic.version = 11 : i64} {
  func.func @linear_kernel(%arg0: i32, %arg1: memref<2x768xf32, #tpu.memory_space<vmem>>, %arg2: memref<10x768xf32, #tpu.memory_space<vmem>>, %arg3: memref<1x10xf32, #tpu.memory_space<vmem>>, %arg4: memref<2x10xf32, #tpu.memory_space<vmem>>) attributes {dimension_semantics = [#tpu.dimension_semantics<parallel>], iteration_bounds = array<i64: 1>, scalar_prefetch = 0 : i64, scratch_operands = 0 : i64, tpu.core_type = #tpu.core_type<tc>, window_params = [{transform_indices = @transform_0, window_bounds = array<i64: 2, 768>}, {pipeline_mode = #tpu.pipeline_mode<synchronous>, transform_indices = @transform_1, window_bounds = array<i64: 10, 768>}, {pipeline_mode = #tpu.pipeline_mode<synchronous>, transform_indices = @transform_2, window_bounds = array<i64: 1, 10>}, {transform_indices = @transform_3, window_bounds = array<i64: 2, 10>}]} {
    %c0 = arith.constant 0 : index
    %c0_0 = arith.constant 0 : index
    %0 = vector.load %arg1[%c0, %c0_0] : memref<2x768xf32, #tpu.memory_space<vmem>>, vector<2x768xf32>
    %c0_1 = arith.constant 0 : index
    %c0_2 = arith.constant 0 : index
    %1 = vector.load %arg2[%c0_1, %c0_2] : memref<10x768xf32, #tpu.memory_space<vmem>>, vector<10x768xf32>
    %cst = arith.constant dense<0.000000e+00> : vector<2x10xf32>
    %2 = tpu.matmul %0, %1, %cst {dimension_numbers = #tpu.dot_dimension_numbers<[1], [1], [0], [0], [0, 0, 1, 0], [], []>} : vector<2x768xf32>, vector<10x768xf32>, vector<2x10xf32> -> vector<2x10xf32>
    %c0_3 = arith.constant 0 : index
    %c0_4 = arith.constant 0 : index
    %3 = vector.load %arg3[%c0_3, %c0_4] : memref<1x10xf32, #tpu.memory_space<vmem>>, vector<1x10xf32>
    %4 = vector.broadcast %3 : vector<1x10xf32> to vector<2x10xf32>
    %5 = arith.addf %2, %4 : vector<2x10xf32>
    %c0_5 = arith.constant 0 : index
    %c0_6 = arith.constant 0 : index
    %6 = vector.load %arg4[%c0_5, %c0_6] : memref<2x10xf32, #tpu.memory_space<vmem>>, vector<2x10xf32>
    tpu.vector_store %arg4[%c0_5, %c0_6], %5 {strides = array<i32>} : memref<2x10xf32, #tpu.memory_space<vmem>>, vector<2x10xf32>,
    return
  }
  func.func @transform_0(%arg0: i32) -> (i32, i32) {
    %c0_i32 = arith.constant 0 : i32
    %c0_i32_0 = arith.constant 0 : i32
    return %arg0, %c0_i32 : i32, i32
  }
  func.func @transform_1(%arg0: i32) -> (i32, i32) {
    %c0_i32 = arith.constant 0 : i32
    %c0_i32_0 = arith.constant 0 : i32
    %c0_i32_1 = arith.constant 0 : i32
    return %c0_i32, %c0_i32_0 : i32, i32
  }
  func.func @transform_2(%arg0: i32) -> (i32, i32) {
    %c0_i32 = arith.constant 0 : i32
    %c0_i32_0 = arith.constant 0 : i32
    %c0_i32_1 = arith.constant 0 : i32
    return %c0_i32, %c0_i32_0 : i32, i32
  }
  func.func @transform_3(%arg0: i32) -> (i32, i32) {
    %c0_i32 = arith.constant 0 : i32
    %c0_i32_0 = arith.constant 0 : i32
    return %arg0, %c0_i32 : i32, i32
  }
}

</mosaic_0001>

<llo_original>
// kernel: tpu_custom_call.1
$region0: #{tpu_custom_call.1}
  #allocation0 [shape = 'u32[]', space=smem, size = 0x4, offset = 0x4, fixed_abs, tag = 'smem constant byte address 0x4 - core index']
  #allocation1 [shape = 'u32[144,128]{1,0:T(1,128)}', space=vmem, size = 0x12000, scoped, tag = 'internal scratch']
  %s0 = inlined_call_operand.hbm [shape: f32[2,768], index: 0, kind: input, shape index: {}]
  %s1 = inlined_call_operand.hbm [shape: f32[10,768], index: 1, kind: input, shape index: {}]
  %s2 = inlined_call_operand.vmem [shape: f32[1,10], index: 2, kind: input, shape index: {}]
  %s3 = inlined_call_operand.hbm [shape: f32[2,10], index: 3, kind: output, shape index: {}]
  %s4 = sld [smem:[#allocation0]]
  $region30: #{tpu_custom_call.1} parent=0
    _
  %s6 = ssub.s32 1, %s4
  %s7 = scalar_select 0, %s6, %s4
  $region1: #{tpu_custom_call.1} parent=0
    #allocation2 [shape = 'u8[6144]{0}', space=vmem, size = 0x1800, scoped, tag = 'input window, operand 0, single buffered']
    #allocation3 [shape = 's32[1]{0}', space=sflag, size = 0x4, scoped, tag = 'scoped memory for tpu_custom_call.1']
    #allocation4 [shape = 's32[1]{0}', space=sflag, size = 0x4, scoped, tag = 'scoped memory for tpu_custom_call.1']
    #allocation5 [shape = 'u8[49152]{0}', space=vmem, size = 0xc000, scoped, tag = 'input window, operand 1, single buffered']
    #allocation6 [shape = 's32[1]{0}', space=sflag, size = 0x4, scoped, tag = 'scoped memory for tpu_custom_call.1']
    #allocation7 [shape = 'u8[1024]{0}', space=vmem, size = 0x400, scoped, tag = 'output window, operand 0, single buffered']
    %8 = vsyncpa [#allocation3], 0
    %9 = vsyncpa [#allocation6], 0
    %10 = vsyncpa [#allocation4], 0
    // Predicated region
    $region2: #{tpu_custom_call.1} parent=1 // pred_check
      _
    $region3: #{tpu_custom_call.1} parent=1 // pred_check_branch
      %12 = sbr.rel (0) target = $region5
    $region4: #{tpu_custom_call.1} parent=1 // pred_region
      %s14 = ssub.s32 192, 192
      %15 = vsyncadd [#allocation3], %s14
      %s17 = sshll.u32 [#allocation2], 4
      %s18 = int_to_ptr.vmem [resolvable:$true] %s17
      %20 = dma.hbm_to_vmem [thread:$0]  %s0, 192, %s18, [#allocation3]
    $region5: #{tpu_custom_call.1} parent=1 // pred_fallthru
      _
    // Predicated region
    $region6: #{tpu_custom_call.1} parent=1 // pred_check
      _
    $region7: #{tpu_custom_call.1} parent=1 // pred_check_branch
      %22 = sbr.rel (0) target = $region9
    $region8: #{tpu_custom_call.1} parent=1 // pred_region
      %s24 = ssub.s32 1536, 1536
      %25 = vsyncadd [#allocation6], %s24
      %s26 = sshll.u32 [#allocation5], 4
      %s27 = int_to_ptr.vmem [resolvable:$true] %s26
      %32 = dma.hbm_to_vmem [thread:$0]  %s1, 1536, %s27, [#allocation6], 768, 768, 48
    $region9: #{tpu_custom_call.1} parent=1 // pred_fallthru
      _
    // Predicated region
    $region10: #{tpu_custom_call.1} parent=1 // pred_check
      _
    $region11: #{tpu_custom_call.1} parent=1 // pred_check_branch
      %34 = sbr.rel (0) target = $region13
    $region12: #{tpu_custom_call.1} parent=1 // pred_region
      _
    $region13: #{tpu_custom_call.1} parent=1 // pred_fallthru
      _
    // Predicated region
    $region14: #{tpu_custom_call.1} parent=1 // pred_check
      _
    $region15: #{tpu_custom_call.1} parent=1 // pred_check_branch
      %36 = sbr.rel (0) target = $region17
    $region16: #{tpu_custom_call.1} parent=1 // pred_region
      %37 = dma.done [#allocation3], 192
    $region17: #{tpu_custom_call.1} parent=1 // pred_fallthru
      _
    // Predicated region
    $region18: #{tpu_custom_call.1} parent=1 // pred_check
      _
    $region19: #{tpu_custom_call.1} parent=1 // pred_check_branch
      %39 = sbr.rel (0) target = $region21
    $region20: #{tpu_custom_call.1} parent=1 // pred_region
      %40 = dma.done [#allocation6], 1536
    $region21: #{tpu_custom_call.1} parent=1 // pred_fallthru
      _
    %v41 = vld [vmem:[#allocation2] sm:$0xff]
    %v42 = vld [vmem:[#allocation2 + $0x8] sm:$0xf]
    %v43 = vld [vmem:[#allocation5] sm:$0xff]
    %v44 = vld [vmem:[#allocation5 + $0x8] sm:$0xff]
    %v45 = vld [vmem:[#allocation5 + $0x10] sm:$0xff]
    %v46 = vld [vmem:[#allocation5 + $0x18] sm:$0xff]
    %v47 = vld [vmem:[#allocation5 + $0x20] sm:$0xff]
    %v48 = vld [vmem:[#allocation5 + $0x28] sm:$0xff]
    %v49 = vld [vmem:[#allocation5 + $0x30] sm:$0x3]
    %v50 = vld [vmem:[#allocation5 + $0x38] sm:$0x3]
    %v51 = vld [vmem:[#allocation5 + $0x40] sm:$0x3]
    %v52 = vld [vmem:[#allocation5 + $0x48] sm:$0x3]
    %v53 = vld [vmem:[#allocation5 + $0x50] sm:$0x3]
    %v54 = vld [vmem:[#allocation5 + $0x58] sm:$0x3]
    %v55 = vld [vmem:[%s2] sm:$0x1]
    %v57 = vlaneseq
    %v58 = vshrl.u32 %v57, 7
    %v59 = vsub.s32 0, %v58
    %v60 = vrot.slane %v55, %v59
    %v64 = vcombine.high %v41, %v41
    %v66 = vunpack.c.l.s4 1983009808
    %v67 = vunpack.c.0.s8 %v66
    %v68 = vlaneseq
    %v69 = vshrl.u32 %v68, 7
    %v70 = vsub.s32 %v67, %v69
    %v71 = vrot.slane %v41, %v70
    %v73 = vunpack.c.l.s4 1983009808
    %v74 = vunpack.c.0.s8 %v73
    %v75 = vlaneseq
    %v76 = vshrl.u32 %v75, 7
    %v77 = vsub.s32 %v74, %v76
    %v78 = vrot.slane %v64, %v77
    %v79 = vcombine.high %v71, %v71
    %v80 = vcombine.high %v78, %v78
    %v82 = vunpack.c.l.s4 1983009808
    %v83 = vunpack.c.0.s8 %v82
    %v84 = vlaneseq
    %v85 = vshrl.u32 %v84, 7
    %v86 = vsub.s32 %v83, %v85
    %v87 = vrot.slane %v42, %v86
    %v88 = vcombine.high %v87, %v87
    %95 = vmatprep.subr.mxu0 0.0
    %96 = vmatpush1.xpose.msra.mxu0 0.0
    %97 = vmatprep.subr.mxu0 0.0
    %98 = vmatpush1.xpose.msra.mxu0 0.0
    %99 = vmatprep.subr.mxu0 0.0
    %100 = vmatpush1.xpose.msra.mxu0 0.0
    %101 = vmatprep.subr.mxu0 0.0
    %102 = vmatpush1.xpose.msra.mxu0 0.0
    %103 = vmatprep.subr.mxu0 0.0
    %104 = vmatpush1.xpose.msra.mxu0 0.0
    %105 = vmatprep.subr.mxu0 0.0
    %106 = vmatpush1.xpose.msra.mxu0 0.0
    %107 = vmatprep.subr.mxu0 0.0
    %108 = vmatpush1.xpose.msra.mxu0 0.0
    %109 = vmatprep.subr.mxu0 0.0
    %110 = vmatpush1.xpose.msra.mxu0 0.0
    %111 = vmatprep.subr.mxu0 0.0
    %112 = vmatpush1.xpose.msra.mxu0 0.0
    %113 = vmatprep.subr.mxu0 0.0
    %114 = vmatpush1.xpose.msra.mxu0 0.0
    %115 = vmatprep.subr.mxu0 0.0
    %116 = vmatpush1.xpose.msra.mxu0 0.0
    %117 = vmatprep.subr.mxu0 0.0
    %118 = vmatpush1.xpose.msra.mxu0 0.0
    %119 = vmatprep.subr.mxu0 0.0
    %120 = vmatpush1.xpose.msra.mxu0 0.0
    %121 = vmatprep.subr.mxu0 0.0
    %122 = vmatpush1.xpose.msra.mxu0 0.0
    %123 = vmatprep.subr.mxu0 %v50
    %124 = vmatpush1.xpose.msra.mxu0 %v49
    %125 = vmatprep.subr.mxu0 %v44
    %126 = vmatpush1.xpose.msra.mxu0 %v43
    %127 = vmatprep.subr.mxu0 0.0
    %128 = vmatpush2.xpose.msra.mxu0 0.0
    %129 = vmatprep.subr.mxu0 0.0
    %130 = vmatpush2.xpose.msra.mxu0 0.0
    %131 = vmatprep.subr.mxu0 0.0
    %132 = vmatpush2.xpose.msra.mxu0 0.0
    %133 = vmatprep.subr.mxu0 0.0
    %134 = vmatpush2.xpose.msra.mxu0 0.0
    %135 = vmatprep.subr.mxu0 0.0
    %136 = vmatpush2.xpose.msra.mxu0 0.0
    %137 = vmatprep.subr.mxu0 0.0
    %138 = vmatpush2.xpose.msra.mxu0 0.0
    %139 = vmatprep.subr.mxu0 0.0
    %140 = vmatpush2.xpose.msra.mxu0 0.0
    %141 = vmatprep.subr.mxu0 0.0
    %142 = vmatpush2.xpose.msra.mxu0 0.0
    %143 = vmatprep.subr.mxu0 0.0
    %144 = vmatpush2.xpose.msra.mxu0 0.0
    %145 = vmatprep.subr.mxu0 0.0
    %146 = vmatpush2.xpose.msra.mxu0 0.0
    %147 = vmatprep.subr.mxu0 0.0
    %148 = vmatpush2.xpose.msra.mxu0 0.0
    %149 = vmatprep.subr.mxu0 0.0
    %150 = vmatpush2.xpose.msra.mxu0 0.0
    %151 = vmatprep.subr.mxu0 0.0
    %152 = vmatpush2.xpose.msra.mxu0 0.0
    %153 = vmatprep.subr.mxu0 0.0
    %154 = vmatpush2.xpose.msra.mxu0 0.0
    %155 = vmatprep.subr.mxu0 0.0
    %156 = vmatpush2.xpose.msra.mxu0 0.0
    %157 = vmatprep.subr.mxu0 0.0
    %158 = vmatpush2.xpose.msra.mxu0 0.0
    %159 = vmatprep.mubr.f32.mxu0 %v79
    %160 = vmatmul.mubr.f32.gmra.mxu0 %v71
    %v161 = vpop.f32.mrf.mxu0
    %v162 = vadd.f32 %v60, %v161
    %v163 = vpop.f32.mrf.mxu0
    %164 = vdwg.mxu0
    %165 = vmatprep.subr.mxu0 0.0
    %166 = vmatpush1.xpose.msra.mxu0 0.0
    %167 = vmatprep.subr.mxu0 0.0
    %168 = vmatpush1.xpose.msra.mxu0 0.0
    %169 = vmatprep.subr.mxu0 0.0
    %170 = vmatpush1.xpose.msra.mxu0 0.0
    %171 = vmatprep.subr.mxu0 0.0
    %172 = vmatpush1.xpose.msra.mxu0 0.0
    %173 = vmatprep.subr.mxu0 0.0
    %174 = vmatpush1.xpose.msra.mxu0 0.0
    %175 = vmatprep.subr.mxu0 0.0
    %176 = vmatpush1.xpose.msra.mxu0 0.0
    %177 = vmatprep.subr.mxu0 0.0
    %178 = vmatpush1.xpose.msra.mxu0 0.0
    %179 = vmatprep.subr.mxu0 0.0
    %180 = vmatpush1.xpose.msra.mxu0 0.0
    %181 = vmatprep.subr.mxu0 0.0
    %182 = vmatpush1.xpose.msra.mxu0 0.0
    %183 = vmatprep.subr.mxu0 0.0
    %184 = vmatpush1.xpose.msra.mxu0 0.0
    %185 = vmatprep.subr.mxu0 0.0
    %186 = vmatpush1.xpose.msra.mxu0 0.0
    %187 = vmatprep.subr.mxu0 0.0
    %188 = vmatpush1.xpose.msra.mxu0 0.0
    %189 = vmatprep.subr.mxu0 0.0
    %190 = vmatpush1.xpose.msra.mxu0 0.0
    %191 = vmatprep.subr.mxu0 0.0
    %192 = vmatpush1.xpose.msra.mxu0 0.0
    %193 = vmatprep.subr.mxu0 %v52
    %194 = vmatpush1.xpose.msra.mxu0 %v51
    %195 = vmatprep.subr.mxu0 %v46
    %196 = vmatpush1.xpose.msra.mxu0 %v45
    %197 = vmatprep.subr.mxu0 0.0
    %198 = vmatpush2.xpose.msra.mxu0 0.0
    %199 = vmatprep.subr.mxu0 0.0
    %200 = vmatpush2.xpose.msra.mxu0 0.0
    %201 = vmatprep.subr.mxu0 0.0
    %202 = vmatpush2.xpose.msra.mxu0 0.0
    %203 = vmatprep.subr.mxu0 0.0
    %204 = vmatpush2.xpose.msra.mxu0 0.0
    %205 = vmatprep.subr.mxu0 0.0
    %206 = vmatpush2.xpose.msra.mxu0 0.0
    %207 = vmatprep.subr.mxu0 0.0
    %208 = vmatpush2.xpose.msra.mxu0 0.0
    %209 = vmatprep.subr.mxu0 0.0
    %210 = vmatpush2.xpose.msra.mxu0 0.0
    %211 = vmatprep.subr.mxu0 0.0
    %212 = vmatpush2.xpose.msra.mxu0 0.0
    %213 = vmatprep.subr.mxu0 0.0
    %214 = vmatpush2.xpose.msra.mxu0 0.0
    %215 = vmatprep.subr.mxu0 0.0
    %216 = vmatpush2.xpose.msra.mxu0 0.0
    %217 = vmatprep.subr.mxu0 0.0
    %218 = vmatpush2.xpose.msra.mxu0 0.0
    %219 = vmatprep.subr.mxu0 0.0
    %220 = vmatpush2.xpose.msra.mxu0 0.0
    %221 = vmatprep.subr.mxu0 0.0
    %222 = vmatpush2.xpose.msra.mxu0 0.0
    %223 = vmatprep.subr.mxu0 0.0
    %224 = vmatpush2.xpose.msra.mxu0 0.0
    %225 = vmatprep.subr.mxu0 0.0
    %226 = vmatpush2.xpose.msra.mxu0 0.0
    %227 = vmatprep.subr.mxu0 0.0
    %228 = vmatpush2.xpose.msra.mxu0 0.0
    %229 = vmatprep.mubr.f32.mxu0 %v80
    %230 = vmatmul.mubr.f32.gmra.mxu0 %v78
    %v231 = vpop.f32.mrf.mxu0
    %v232 = vadd.f32 %v162, %v231
    %v233 = vpop.f32.mrf.mxu0
    %234 = vdwg.mxu0
    %235 = vmatprep.subr.mxu0 0.0
    %236 = vmatpush1.xpose.msra.mxu0 0.0
    %237 = vmatprep.subr.mxu0 0.0
    %238 = vmatpush1.xpose.msra.mxu0 0.0
    %239 = vmatprep.subr.mxu0 0.0
    %240 = vmatpush1.xpose.msra.mxu0 0.0
    %241 = vmatprep.subr.mxu0 0.0
    %242 = vmatpush1.xpose.msra.mxu0 0.0
    %243 = vmatprep.subr.mxu0 0.0
    %244 = vmatpush1.xpose.msra.mxu0 0.0
    %245 = vmatprep.subr.mxu0 0.0
    %246 = vmatpush1.xpose.msra.mxu0 0.0
    %247 = vmatprep.subr.mxu0 0.0
    %248 = vmatpush1.xpose.msra.mxu0 0.0
    %249 = vmatprep.subr.mxu0 0.0
    %250 = vmatpush1.xpose.msra.mxu0 0.0
    %251 = vmatprep.subr.mxu0 0.0
    %252 = vmatpush1.xpose.msra.mxu0 0.0
    %253 = vmatprep.subr.mxu0 0.0
    %254 = vmatpush1.xpose.msra.mxu0 0.0
    %255 = vmatprep.subr.mxu0 0.0
    %256 = vmatpush1.xpose.msra.mxu0 0.0
    %257 = vmatprep.subr.mxu0 0.0
    %258 = vmatpush1.xpose.msra.mxu0 0.0
    %259 = vmatprep.subr.mxu0 0.0
    %260 = vmatpush1.xpose.msra.mxu0 0.0
    %261 = vmatprep.subr.mxu0 0.0
    %262 = vmatpush1.xpose.msra.mxu0 0.0
    %263 = vmatprep.subr.mxu0 %v54
    %264 = vmatpush1.xpose.msra.mxu0 %v53
    %265 = vmatprep.subr.mxu0 %v48
    %266 = vmatpush1.xpose.msra.mxu0 %v47
    %267 = vmatprep.subr.mxu0 0.0
    %268 = vmatpush2.xpose.msra.mxu0 0.0
    %269 = vmatprep.subr.mxu0 0.0
    %270 = vmatpush2.xpose.msra.mxu0 0.0
    %271 = vmatprep.subr.mxu0 0.0
    %272 = vmatpush2.xpose.msra.mxu0 0.0
    %273 = vmatprep.subr.mxu0 0.0
    %274 = vmatpush2.xpose.msra.mxu0 0.0
    %275 = vmatprep.subr.mxu0 0.0
    %276 = vmatpush2.xpose.msra.mxu0 0.0
    %277 = vmatprep.subr.mxu0 0.0
    %278 = vmatpush2.xpose.msra.mxu0 0.0
    %279 = vmatprep.subr.mxu0 0.0
    %280 = vmatpush2.xpose.msra.mxu0 0.0
    %281 = vmatprep.subr.mxu0 0.0
    %282 = vmatpush2.xpose.msra.mxu0 0.0
    %283 = vmatprep.subr.mxu0 0.0
    %284 = vmatpush2.xpose.msra.mxu0 0.0
    %285 = vmatprep.subr.mxu0 0.0
    %286 = vmatpush2.xpose.msra.mxu0 0.0
    %287 = vmatprep.subr.mxu0 0.0
    %288 = vmatpush2.xpose.msra.mxu0 0.0
    %289 = vmatprep.subr.mxu0 0.0
    %290 = vmatpush2.xpose.msra.mxu0 0.0
    %291 = vmatprep.subr.mxu0 0.0
    %292 = vmatpush2.xpose.msra.mxu0 0.0
    %293 = vmatprep.subr.mxu0 0.0
    %294 = vmatpush2.xpose.msra.mxu0 0.0
    %295 = vmatprep.subr.mxu0 0.0
    %296 = vmatpush2.xpose.msra.mxu0 0.0
    %297 = vmatprep.subr.mxu0 0.0
    %298 = vmatpush2.xpose.msra.mxu0 0.0
    %299 = vmatprep.mubr.f32.mxu0 %v88
    %300 = vmatmul.mubr.f32.gmra.mxu0 %v87
    %v301 = vpop.f32.mrf.mxu0
    %v302 = vadd.f32 %v232, %v301
    %v303 = vpop.f32.mrf.mxu0
    %304 = vdwg.mxu0
    %vm305 = vcmask 74752
    %306 = vst.msk [vmem:[#allocation7] sm:$0x3] %vm305, %v302
    // Predicated region
    $region22: #{tpu_custom_call.1} parent=1 // pred_check
      _
    $region23: #{tpu_custom_call.1} parent=1 // pred_check_branch
      %308 = sbr.rel (0) target = $region25
    $region24: #{tpu_custom_call.1} parent=1 // pred_region
      %s310 = ssub.s32 32, 32
      %311 = vsyncadd [#allocation4], %s310
      %s313 = sshll.u32 [#allocation7], 4
      %s314 = int_to_ptr.vmem [resolvable:$true] %s313
      %316 = dma.vmem_to_hbm [thread:$0]  %s314, 32, %s3, [#allocation4]
    $region25: #{tpu_custom_call.1} parent=1 // pred_fallthru
      _
    // Predicated region
    $region26: #{tpu_custom_call.1} parent=1 // pred_check
      _
    $region27: #{tpu_custom_call.1} parent=1 // pred_check_branch
      %318 = sbr.rel (0) target = $region29
    $region28: #{tpu_custom_call.1} parent=1 // pred_region
      %319 = dma.done [#allocation4], 32
    $region29: #{tpu_custom_call.1} parent=1 // pred_fallthru
      _
    %320 = vsyncpa [#allocation3], 1
    %321 = vsyncpa [#allocation6], 1
    %322 = vsyncpa [#allocation4], 1

</llo_original>
